<compile_context>
chip_gen: v6e
topology: v6e:2x2x1
jax: 0.10.0
libtpu: 0.0.40
codegen_flags: <defaults>
</compile_context>

<pallas_src>
import functools
import math

import jax
import jax.numpy as jnp
from jax.experimental import pallas as pl
from jax.experimental.pallas import tpu as pltpu


def _round_up(x, n):
    return (x + n - 1) // n * n


def _ffn_kernel(x_ref, w1_ref, b1_ref, w2_ref, b2_ref, o_ref):
    # x_ref : (TM, dim_p)        bf16  (pipelined per grid step)
    # w1_ref: (dim_p, hidden_p)  bf16  (resident across grid steps)
    # b1_ref: (1, hidden_p)      f32   (resident)
    # w2_ref: (hidden_p, dim_p)  bf16  (resident)
    # b2_ref: (1, dim_p)         f32   (resident)
    # o_ref : (TM, dim_p)        f32

    # Linear 1: bf16 MXU matmul, f32 accumulate, f32 bias add.
    h = jnp.dot(x_ref[...], w1_ref[...], preferred_element_type=jnp.float32)
    h = h + b1_ref[...]

    # Exact GELU (PyTorch nn.GELU default, approximate='none'), kept in f32:
    #   gelu(x) = 0.5 * x * (1 + erf(x / sqrt(2)))
    inv_sqrt2 = jnp.float32(1.0 / math.sqrt(2.0))
    g = 0.5 * h * (1.0 + jax.lax.erf(h * inv_sqrt2))

    # Linear 2: cast activation to bf16 for the MXU, f32 accumulate + bias.
    out = jnp.dot(g.astype(jnp.bfloat16), w2_ref[...],
                  preferred_element_type=jnp.float32)
    out = out + b2_ref[...]
    o_ref[...] = out.astype(o_ref.dtype)


@functools.partial(jax.jit, static_argnames=("tm",))
def feed_forward(x, w1, b1, w2, b2, *, tm=256):
    """x: (batch, seq, dim) float32. Returns (batch, seq, dim) float32."""
    batch, seq, dim = x.shape
    hidden = w1.shape[1]
    m = batch * seq

    # --- Padding for lane-dense (128) feature dims and 8-aligned token tiles.
    dim_p = _round_up(dim, 128)
    hid_p = _round_up(hidden, 128)
    tm = min(tm, _round_up(m, 8))        # token tile, multiple of 8 sublanes
    m_p = _round_up(m, tm)
    grid = (m_p // tm,)

    x2d = x.reshape(m, dim)
    x_pad = jnp.pad(x2d, ((0, m_p - m), (0, dim_p - dim)))
    w1_pad = jnp.pad(w1, ((0, dim_p - dim), (0, hid_p - hidden)))
    w2_pad = jnp.pad(w2, ((0, hid_p - hidden), (0, dim_p - dim)))
    b1_pad = jnp.pad(b1.reshape(1, hidden), ((0, 0), (0, hid_p - hidden)))
    b2_pad = jnp.pad(b2.reshape(1, dim), ((0, 0), (0, dim_p - dim)))

    # bf16 on the MXU; biases stay f32 for the f32 bias-add / GELU path.
    x_bf = x_pad.astype(jnp.bfloat16)
    w1_bf = w1_pad.astype(jnp.bfloat16)
    w2_bf = w2_pad.astype(jnp.bfloat16)

    # --- VMEM budget: resident weights + double-buffered tiles + intermediate.
    bytes_w = (dim_p * hid_p + hid_p * dim_p) * 2        # bf16 weights, resident
    bytes_b = (hid_p + dim_p) * 4                        # f32 biases
    bytes_x = 2 * tm * dim_p * 2                         # 2x bf16 x tiles
    bytes_o = 2 * tm * dim_p * 4                         # 2x f32 out tiles
    bytes_h = tm * hid_p * (4 + 2)                       # f32 h/g + bf16 copy
    vmem_bytes = bytes_w + bytes_b + bytes_x + bytes_o + bytes_h + (8 << 20)
    vmem_bytes = int(min(max(vmem_bytes, 16 << 20), 64 << 20))

    cost = pl.CostEstimate(
        flops=4 * m_p * dim_p * hid_p,                   # two matmuls
        transcendentals=m_p * hid_p,                     # erf
        bytes_accessed=(m_p * dim_p * 2                  # x in (bf16)
                        + 2 * dim_p * hid_p * 2          # weights (bf16)
                        + (hid_p + dim_p) * 4            # biases (f32)
                        + m_p * dim_p * 4),              # out (f32)
    )

    out_pad = pl.pallas_call(
        _ffn_kernel,
        out_shape=jax.ShapeDtypeStruct((m_p, dim_p), jnp.float32),
        grid=grid,
        in_specs=[
            pl.BlockSpec((tm, dim_p), lambda i: (i, 0)),     # x tile (pipelined)
            pl.BlockSpec((dim_p, hid_p), lambda i: (0, 0)),  # w1 (resident)
            pl.BlockSpec((1, hid_p), lambda i: (0, 0)),      # b1 (resident)
            pl.BlockSpec((hid_p, dim_p), lambda i: (0, 0)),  # w2 (resident)
            pl.BlockSpec((1, dim_p), lambda i: (0, 0)),      # b2 (resident)
        ],
        out_specs=pl.BlockSpec((tm, dim_p), lambda i: (i, 0)),
        compiler_params=pltpu.CompilerParams(
            dimension_semantics=("parallel",),               # megacore on v7x
            vmem_limit_bytes=vmem_bytes,
        ),
        cost_estimate=cost,
    )(x_bf, w1_bf, b1_pad, w2_bf, b2_pad)

    return out_pad[:m, :dim].reshape(batch, seq, dim)


def _init_linear(key, fan_in, fan_out):
    # PyTorch nn.Linear default init: U(-1/sqrt(fan_in), 1/sqrt(fan_in))
    kw, kb = jax.random.split(key)
    bound = 1.0 / math.sqrt(fan_in)
    # Stored as (in, out) so the kernel does x @ w (PyTorch stores (out, in)).
    w = jax.random.uniform(kw, (fan_in, fan_out), jnp.float32, -bound, bound)
    b = jax.random.uniform(kb, (fan_out,), jnp.float32, -bound, bound)
    return w, b


if __name__ == "__main__":
    batch, seq, dim, hidden_dim = 2, 8, 32, 64

    key = jax.random.PRNGKey(0)
    kx, k1, k2 = jax.random.split(key, 3)

    x = jax.random.normal(kx, (batch, seq, dim), jnp.float32)
    w1, b1 = _init_linear(k1, dim, hidden_dim)
    w2, b2 = _init_linear(k2, hidden_dim, dim)

    out = feed_forward(x, w1, b1, w2, b2)
    out = jax.block_until_ready(out)

    # Pure-JAX f32 reference (exact-erf GELU, matching nn.GELU default).
    # Kernel runs the matmuls in bf16 -> compare with bf16-level tolerance.
    h_ref = x @ w1 + b1
    g_ref = 0.5 * h_ref * (1.0 + jax.lax.erf(h_ref / jnp.sqrt(2.0)))
    ref = g_ref @ w2 + b2
    assert out.shape == ref.shape
    assert jnp.allclose(out, ref, atol=2e-2, rtol=2e-2), "mismatch vs reference"

    print("KERNEL_OK")
</pallas_src>

<mosaic_0001>
module attributes {stable_mosaic.version = 11 : i64} {
  func.func @_ffn_kernel(%arg0: i32, %arg1: memref<16x128xbf16, #tpu.memory_space<vmem>>, %arg2: memref<128x128xbf16, #tpu.memory_space<vmem>>, %arg3: memref<1x128xf32, #tpu.memory_space<vmem>>, %arg4: memref<128x128xbf16, #tpu.memory_space<vmem>>, %arg5: memref<1x128xf32, #tpu.memory_space<vmem>>, %arg6: memref<16x128xf32, #tpu.memory_space<vmem>>) attributes {dimension_semantics = [#tpu.dimension_semantics<parallel>], iteration_bounds = array<i64: 1>, scalar_prefetch = 0 : i64, scratch_operands = 0 : i64, tpu.core_type = #tpu.core_type<tc>, window_params = [{transform_indices = @transform_0, window_bounds = array<i64: 16, 128>}, {pipeline_mode = #tpu.pipeline_mode<synchronous>, transform_indices = @transform_1, window_bounds = array<i64: 128, 128>}, {pipeline_mode = #tpu.pipeline_mode<synchronous>, transform_indices = @transform_2, window_bounds = array<i64: 1, 128>}, {pipeline_mode = #tpu.pipeline_mode<synchronous>, transform_indices = @transform_3, window_bounds = array<i64: 128, 128>}, {pipeline_mode = #tpu.pipeline_mode<synchronous>, transform_indices = @transform_4, window_bounds = array<i64: 1, 128>}, {transform_indices = @transform_5, window_bounds = array<i64: 16, 128>}]} {
    %c0 = arith.constant 0 : index
    %c0_0 = arith.constant 0 : index
    %0 = vector.load %arg1[%c0, %c0_0] : memref<16x128xbf16, #tpu.memory_space<vmem>>, vector<16x128xbf16>
    %c0_1 = arith.constant 0 : index
    %c0_2 = arith.constant 0 : index
    %1 = vector.load %arg2[%c0_1, %c0_2] : memref<128x128xbf16, #tpu.memory_space<vmem>>, vector<128x128xbf16>
    %cst = arith.constant dense<0.000000e+00> : vector<16x128xf32>
    %2 = tpu.matmul %0, %1, %cst {dimension_numbers = #tpu.dot_dimension_numbers<[1], [0], [0], [1], [0, 0, 1, 1], [], []>} : vector<16x128xbf16>, vector<128x128xbf16>, vector<16x128xf32> -> vector<16x128xf32>
    %c0_3 = arith.constant 0 : index
    %c0_4 = arith.constant 0 : index
    %3 = vector.load %arg3[%c0_3, %c0_4] : memref<1x128xf32, #tpu.memory_space<vmem>>, vector<1x128xf32>
    %4 = vector.broadcast %3 : vector<1x128xf32> to vector<16x128xf32>
    %5 = arith.addf %2, %4 : vector<16x128xf32>
    %cst_5 = arith.constant 5.000000e-01 : f32
    %6 = vector.broadcast %cst_5 : f32 to vector<16x128xf32>
    %7 = arith.mulf %6, %5 : vector<16x128xf32>
    %cst_6 = arith.constant 0.707106769 : f32
    %8 = vector.broadcast %cst_6 : f32 to vector<16x128xf32>
    %9 = arith.mulf %5, %8 : vector<16x128xf32>
    %10 = math.erf %9 : vector<16x128xf32>
    %cst_7 = arith.constant 1.000000e+00 : f32
    %11 = vector.broadcast %cst_7 : f32 to vector<16x128xf32>
    %12 = arith.addf %11, %10 : vector<16x128xf32>
    %13 = arith.mulf %7, %12 : vector<16x128xf32>
    %14 = arith.truncf %13 : vector<16x128xf32> to vector<16x128xbf16>
    %c0_8 = arith.constant 0 : index
    %c0_9 = arith.constant 0 : index
    %15 = vector.load %arg4[%c0_8, %c0_9] : memref<128x128xbf16, #tpu.memory_space<vmem>>, vector<128x128xbf16>
    %cst_10 = arith.constant dense<0.000000e+00> : vector<16x128xf32>
    %16 = tpu.matmul %14, %15, %cst_10 {dimension_numbers = #tpu.dot_dimension_numbers<[1], [0], [0], [1], [0, 0, 1, 1], [], []>} : vector<16x128xbf16>, vector<128x128xbf16>, vector<16x128xf32> -> vector<16x128xf32>
    %c0_11 = arith.constant 0 : index
    %c0_12 = arith.constant 0 : index
    %17 = vector.load %arg5[%c0_11, %c0_12] : memref<1x128xf32, #tpu.memory_space<vmem>>, vector<1x128xf32>
    %18 = vector.broadcast %17 : vector<1x128xf32> to vector<16x128xf32>
    %19 = arith.addf %16, %18 : vector<16x128xf32>
    %c0_13 = arith.constant 0 : index
    %c0_14 = arith.constant 0 : index
    %20 = vector.load %arg6[%c0_13, %c0_14] : memref<16x128xf32, #tpu.memory_space<vmem>>, vector<16x128xf32>
    tpu.vector_store %arg6[%c0_13, %c0_14], %19 {strides = array<i32>} : memref<16x128xf32, #tpu.memory_space<vmem>>, vector<16x128xf32>,
    return
  }
  func.func @transform_0(%arg0: i32) -> (i32, i32) {
    %c0_i32 = arith.constant 0 : i32
    %c0_i32_0 = arith.constant 0 : i32
    return %arg0, %c0_i32 : i32, i32
  }
  func.func @transform_1(%arg0: i32) -> (i32, i32) {
    %c0_i32 = arith.constant 0 : i32
    %c0_i32_0 = arith.constant 0 : i32
    %c0_i32_1 = arith.constant 0 : i32
    return %c0_i32, %c0_i32_0 : i32, i32
  }
  func.func @transform_2(%arg0: i32) -> (i32, i32) {
    %c0_i32 = arith.constant 0 : i32
    %c0_i32_0 = arith.constant 0 : i32
    %c0_i32_1 = arith.constant 0 : i32
    return %c0_i32, %c0_i32_0 : i32, i32
  }
  func.func @transform_3(%arg0: i32) -> (i32, i32) {
    %c0_i32 = arith.constant 0 : i32
    %c0_i32_0 = arith.constant 0 : i32
    %c0_i32_1 = arith.constant 0 : i32
    return %c0_i32, %c0_i32_0 : i32, i32
  }
  func.func @transform_4(%arg0: i32) -> (i32, i32) {
    %c0_i32 = arith.constant 0 : i32
    %c0_i32_0 = arith.constant 0 : i32
    %c0_i32_1 = arith.constant 0 : i32
    return %c0_i32, %c0_i32_0 : i32, i32
  }
  func.func @transform_5(%arg0: i32) -> (i32, i32) {
    %c0_i32 = arith.constant 0 : i32
    %c0_i32_0 = arith.constant 0 : i32
    return %arg0, %c0_i32 : i32, i32
  }
}

</mosaic_0001>

<llo_original>
// kernel: feed_forward.1
$region0: #{feed_forward.1}
  #allocation0 [shape = 'u32[]', space=smem, size = 0x4, offset = 0x4, fixed_abs, tag = 'smem constant byte address 0x4 - core index']
  #allocation1 [shape = 'u32[144,128]{1,0:T(1,128)}', space=vmem, size = 0x12000, scoped, tag = 'internal scratch']
  %s0 = inlined_call_operand.vmem [shape: bf16[16,128], index: 0, kind: input, shape index: {}]
  %s1 = inlined_call_operand.vmem [shape: bf16[128,128], index: 1, kind: input, shape index: {}]
  %s2 = inlined_call_operand.vmem [shape: f32[1,128], index: 2, kind: input, shape index: {}]
  %s3 = inlined_call_operand.vmem [shape: bf16[128,128], index: 3, kind: input, shape index: {}]
  %s4 = inlined_call_operand.vmem [shape: f32[1,128], index: 4, kind: input, shape index: {}]
  %s5 = inlined_call_operand.vmem [shape: f32[16,128], index: 5, kind: output, shape index: {}]
  %s6 = sld [smem:[#allocation0]]
  $region30: #{feed_forward.1} parent=0
    _
  %s8 = ssub.s32 1, %s6
  %s9 = scalar_select 0, %s8, %s6
  // Predicated region
  $region2: #{feed_forward.1} parent=0 // pred_check
    _
  $region3: #{feed_forward.1} parent=0 // pred_check_branch
    %11 = sbr.rel (0) target = $region5
  $region4: #{feed_forward.1} parent=0 // pred_region
    _
  $region5: #{feed_forward.1} parent=0 // pred_fallthru
    _
  // Predicated region
  $region6: #{feed_forward.1} parent=0 // pred_check
    _
  $region7: #{feed_forward.1} parent=0 // pred_check_branch
    %13 = sbr.rel (0) target = $region9
  $region8: #{feed_forward.1} parent=0 // pred_region
    _
  $region9: #{feed_forward.1} parent=0 // pred_fallthru
    _
  // Predicated region
  $region10: #{feed_forward.1} parent=0 // pred_check
    _
  $region11: #{feed_forward.1} parent=0 // pred_check_branch
    %15 = sbr.rel (0) target = $region13
  $region12: #{feed_forward.1} parent=0 // pred_region
    _
  $region13: #{feed_forward.1} parent=0 // pred_fallthru
    _
  // Predicated region
  $region14: #{feed_forward.1} parent=0 // pred_check
    _
  $region15: #{feed_forward.1} parent=0 // pred_check_branch
    %17 = sbr.rel (0) target = $region17
  $region16: #{feed_forward.1} parent=0 // pred_region
    _
  $region17: #{feed_forward.1} parent=0 // pred_fallthru
    _
  // Predicated region
  $region18: #{feed_forward.1} parent=0 // pred_check
    _
  $region19: #{feed_forward.1} parent=0 // pred_check_branch
    %19 = sbr.rel (0) target = $region21
  $region20: #{feed_forward.1} parent=0 // pred_region
    _
  $region21: #{feed_forward.1} parent=0 // pred_fallthru
    _
  %v21 = vld [vmem:[%s0] sm:$0xf]
  %v22 = vld [vmem:[%s0 + $0x4] sm:$0xf]
  %v23 = vld [vmem:[%s1] sm:$0xf]
  %v24 = vld [vmem:[%s1 + $0x4] sm:$0xf]
  %v25 = vld [vmem:[%s1 + $0x8] sm:$0xf]
  %v26 = vld [vmem:[%s1 + $0xc] sm:$0xf]
  %v27 = vld [vmem:[%s1 + $0x10] sm:$0xf]
  %v28 = vld [vmem:[%s1 + $0x14] sm:$0xf]
  %v29 = vld [vmem:[%s1 + $0x18] sm:$0xf]
  %v30 = vld [vmem:[%s1 + $0x1c] sm:$0xf]
  %v31 = vld [vmem:[%s1 + $0x20] sm:$0xf]
  %v32 = vld [vmem:[%s1 + $0x24] sm:$0xf]
  %v33 = vld [vmem:[%s1 + $0x28] sm:$0xf]
  %v34 = vld [vmem:[%s1 + $0x2c] sm:$0xf]
  %v35 = vld [vmem:[%s1 + $0x30] sm:$0xf]
  %v36 = vld [vmem:[%s1 + $0x34] sm:$0xf]
  %v37 = vld [vmem:[%s1 + $0x38] sm:$0xf]
  %v38 = vld [vmem:[%s1 + $0x3c] sm:$0xf]
  %v39 = vld [vmem:[%s2] sm:$0x1]
  %v41 = vlaneseq
  %v42 = vshrl.u32 %v41, 7
  %v43 = vsub.s32 0, %v42
  %v44 = vrot.slane %v39, %v43
  %v48 = vunpack.c.l.b16 %v21
  %v49 = vunpack.c.l.b16 %v22
  %v50 = vpack.c.b16 %v49, %v48
  %v68 = vunpack.c.l.b16 %v23
  %v69 = vunpack.c.l.b16 %v24
  %v70 = vunpack.c.l.b16 %v25
  %v71 = vunpack.c.l.b16 %v26
  %v72 = vunpack.c.l.b16 %v27
  %v73 = vunpack.c.l.b16 %v28
  %v74 = vunpack.c.l.b16 %v29
  %v75 = vunpack.c.l.b16 %v30
  %v76 = vunpack.c.l.b16 %v31
  %v77 = vunpack.c.l.b16 %v32
  %v78 = vunpack.c.l.b16 %v33
  %v79 = vunpack.c.l.b16 %v34
  %v80 = vunpack.c.l.b16 %v35
  %v81 = vunpack.c.l.b16 %v36
  %v82 = vunpack.c.l.b16 %v37
  %v83 = vunpack.c.l.b16 %v38
  %v84 = vpack.c.b16 %v69, %v68
  %v85 = vpack.c.b16 %v71, %v70
  %v86 = vpack.c.b16 %v73, %v72
  %v87 = vpack.c.b16 %v75, %v74
  %v88 = vpack.c.b16 %v77, %v76
  %v89 = vpack.c.b16 %v79, %v78
  %v90 = vpack.c.b16 %v81, %v80
  %v91 = vpack.c.b16 %v83, %v82
  %100 = vmatprep.subr.bf16.mxu0 0
  %101 = vmatpush1.bf16.msra.mxu0 %v91
  %102 = vmatprep.subr.bf16.mxu0 0
  %103 = vmatpush1.bf16.msra.mxu0 %v90
  %104 = vmatprep.subr.bf16.mxu0 0
  %105 = vmatpush1.bf16.msra.mxu0 %v89
  %106 = vmatprep.subr.bf16.mxu0 0
  %107 = vmatpush1.bf16.msra.mxu0 %v88
  %108 = vmatprep.subr.bf16.mxu0 0
  %109 = vmatpush1.bf16.msra.mxu0 %v87
  %110 = vmatprep.subr.bf16.mxu0 0
  %111 = vmatpush1.bf16.msra.mxu0 %v86
  %112 = vmatprep.subr.bf16.mxu0 0
  %113 = vmatpush1.bf16.msra.mxu0 %v85
  %114 = vmatprep.subr.bf16.mxu0 0
  %115 = vmatpush1.bf16.msra.mxu0 %v84
  %116 = vmatprep.subr.bf16.mxu0 0
  %117 = vmatpush2.bf16.msra.mxu0 0
  %118 = vmatprep.subr.bf16.mxu0 0
  %119 = vmatpush2.bf16.msra.mxu0 0
  %120 = vmatprep.subr.bf16.mxu0 0
  %121 = vmatpush2.bf16.msra.mxu0 0
  %122 = vmatprep.subr.bf16.mxu0 0
  %123 = vmatpush2.bf16.msra.mxu0 0
  %124 = vmatprep.subr.bf16.mxu0 0
  %125 = vmatpush2.bf16.msra.mxu0 0
  %126 = vmatprep.subr.bf16.mxu0 0
  %127 = vmatpush2.bf16.msra.mxu0 0
  %128 = vmatprep.subr.bf16.mxu0 0
  %129 = vmatpush2.bf16.msra.mxu0 0
  %130 = vmatprep.subr.bf16.mxu0 0
  %131 = vmatpush2.bf16.msra.mxu0 0
  %132 = vmatprep.mubr.bf16.mxu0 0
  %133 = vmatmul.mubr.bf16.gmra.mxu0 %v50
  %v134 = vpop.f32.mrf.mxu0
  %v135 = vadd.f32 %v44, %v134
  %v136 = vpop.f32.mrf.mxu0
  %v137 = vpop.f32.mrf.mxu0
  %v138 = vadd.f32 %v44, %v137
  %v139 = vpop.f32.mrf.mxu0
  %140 = vdwg.mxu0
  %v141 = vmul.f32 %v135, 0.5
  %v142 = vmul.f32 %v138, 0.5
  %v143 = vmul.f32 %v135, 0.70710677
  %v144 = vmul.f32 %v138, 0.70710677
  %v145 = verf.f32.pop %v143
  %v146 = verf.f32.pop %v144
  %v147 = vadd.f32 %v145, 1.0
  %v148 = vadd.f32 %v146, 1.0
  %v149 = vmul.f32 %v141, %v147
  %v150 = vmul.f32 %v142, %v148
  %v151 = vpack.c.bf16 %v150, %v149
  %v152 = vld [vmem:[%s3] sm:$0xf]
  %v153 = vld [vmem:[%s3 + $0x4] sm:$0xf]
  %v154 = vld [vmem:[%s3 + $0x8] sm:$0xf]
  %v155 = vld [vmem:[%s3 + $0xc] sm:$0xf]
  %v156 = vld [vmem:[%s3 + $0x10] sm:$0xf]
  %v157 = vld [vmem:[%s3 + $0x14] sm:$0xf]
  %v158 = vld [vmem:[%s3 + $0x18] sm:$0xf]
  %v159 = vld [vmem:[%s3 + $0x1c] sm:$0xf]
  %v160 = vld [vmem:[%s3 + $0x20] sm:$0xf]
  %v161 = vld [vmem:[%s3 + $0x24] sm:$0xf]
  %v162 = vld [vmem:[%s3 + $0x28] sm:$0xf]
  %v163 = vld [vmem:[%s3 + $0x2c] sm:$0xf]
  %v164 = vld [vmem:[%s3 + $0x30] sm:$0xf]
  %v165 = vld [vmem:[%s3 + $0x34] sm:$0xf]
  %v166 = vld [vmem:[%s3 + $0x38] sm:$0xf]
  %v167 = vld [vmem:[%s3 + $0x3c] sm:$0xf]
  %v168 = vld [vmem:[%s4] sm:$0x1]
  %v170 = vlaneseq
  %v171 = vshrl.u32 %v170, 7
  %v172 = vsub.s32 0, %v171
  %v173 = vrot.slane %v168, %v172
  %v191 = vunpack.c.l.b16 %v152
  %v192 = vunpack.c.l.b16 %v153
  %v193 = vunpack.c.l.b16 %v154
  %v194 = vunpack.c.l.b16 %v155
  %v195 = vunpack.c.l.b16 %v156
  %v196 = vunpack.c.l.b16 %v157
  %v197 = vunpack.c.l.b16 %v158
  %v198 = vunpack.c.l.b16 %v159
  %v199 = vunpack.c.l.b16 %v160
  %v200 = vunpack.c.l.b16 %v161
  %v201 = vunpack.c.l.b16 %v162
  %v202 = vunpack.c.l.b16 %v163
  %v203 = vunpack.c.l.b16 %v164
  %v204 = vunpack.c.l.b16 %v165
  %v205 = vunpack.c.l.b16 %v166
  %v206 = vunpack.c.l.b16 %v167
  %v207 = vpack.c.b16 %v192, %v191
  %v208 = vpack.c.b16 %v194, %v193
  %v209 = vpack.c.b16 %v196, %v195
  %v210 = vpack.c.b16 %v198, %v197
  %v211 = vpack.c.b16 %v200, %v199
  %v212 = vpack.c.b16 %v202, %v201
  %v213 = vpack.c.b16 %v204, %v203
  %v214 = vpack.c.b16 %v206, %v205
  %223 = vmatprep.subr.bf16.mxu0 0
  %224 = vmatpush1.bf16.msra.mxu0 %v214
  %225 = vmatprep.subr.bf16.mxu0 0
  %226 = vmatpush1.bf16.msra.mxu0 %v213
  %227 = vmatprep.subr.bf16.mxu0 0
  %228 = vmatpush1.bf16.msra.mxu0 %v212
  %229 = vmatprep.subr.bf16.mxu0 0
  %230 = vmatpush1.bf16.msra.mxu0 %v211
  %231 = vmatprep.subr.bf16.mxu0 0
  %232 = vmatpush1.bf16.msra.mxu0 %v210
  %233 = vmatprep.subr.bf16.mxu0 0
  %234 = vmatpush1.bf16.msra.mxu0 %v209
  %235 = vmatprep.subr.bf16.mxu0 0
  %236 = vmatpush1.bf16.msra.mxu0 %v208
  %237 = vmatprep.subr.bf16.mxu0 0
  %238 = vmatpush1.bf16.msra.mxu0 %v207
  %239 = vmatprep.subr.bf16.mxu0 0
  %240 = vmatpush2.bf16.msra.mxu0 0
  %241 = vmatprep.subr.bf16.mxu0 0
  %242 = vmatpush2.bf16.msra.mxu0 0
  %243 = vmatprep.subr.bf16.mxu0 0
  %244 = vmatpush2.bf16.msra.mxu0 0
  %245 = vmatprep.subr.bf16.mxu0 0
  %246 = vmatpush2.bf16.msra.mxu0 0
  %247 = vmatprep.subr.bf16.mxu0 0
  %248 = vmatpush2.bf16.msra.mxu0 0
  %249 = vmatprep.subr.bf16.mxu0 0
  %250 = vmatpush2.bf16.msra.mxu0 0
  %251 = vmatprep.subr.bf16.mxu0 0
  %252 = vmatpush2.bf16.msra.mxu0 0
  %253 = vmatprep.subr.bf16.mxu0 0
  %254 = vmatpush2.bf16.msra.mxu0 0
  %255 = vmatprep.mubr.bf16.mxu0 0
  %256 = vmatmul.mubr.bf16.gmra.mxu0 %v151
  %v257 = vpop.f32.mrf.mxu0
  %v258 = vadd.f32 %v173, %v257
  %v259 = vpop.f32.mrf.mxu0
  %v260 = vpop.f32.mrf.mxu0
  %v261 = vadd.f32 %v173, %v260
  %v262 = vpop.f32.mrf.mxu0
  %263 = vdwg.mxu0
  %264 = vst [vmem:[%s5] sm:$0xff] %v258
  %265 = vst [vmem:[%s5 + $0x8] sm:$0xff] %v261
  // Predicated region
  $region22: #{feed_forward.1} parent=0 // pred_check
    _
  $region23: #{feed_forward.1} parent=0 // pred_check_branch
    %267 = sbr.rel (0) target = $region25
  $region24: #{feed_forward.1} parent=0 // pred_region
    _
  $region25: #{feed_forward.1} parent=0 // pred_fallthru
    _
  // Predicated region
  $region26: #{feed_forward.1} parent=0 // pred_check
    _
  $region27: #{feed_forward.1} parent=0 // pred_check_branch
    %269 = sbr.rel (0) target = $region29
  $region28: #{feed_forward.1} parent=0 // pred_region
    _
  $region29: #{feed_forward.1} parent=0 // pred_fallthru
    _

</llo_original>
